<compile_context>
chip_gen: v5e
topology: v5e:2x2
jax: 0.10.0
libtpu: 0.0.40
codegen_flags: <defaults>
</compile_context>

<pallas_src>
import jax
import jax.numpy as jnp
from jax.experimental import pallas as pl
from jax.experimental.pallas import tpu as pltpu


_BN_EPS = 1e-5


# --------------------------------------------------------------------------------------
# Kernels
# --------------------------------------------------------------------------------------

def _fc1_stats_kernel(x_ref, w1_ref, h_ref, stats_ref):
    """Phase 1 (parallel over N-tiles): h = x @ w1 (bf16 MXU, f32 acc), store h as bf16,
    and emit per-tile partial [sum(h); sum(h*h)] packed into an (8, H) block."""
    h = jnp.dot(x_ref[...].astype(jnp.bfloat16), w1_ref[...],
                preferred_element_type=jnp.float32)                  # (tn, H) f32
    h_ref[...] = h.astype(jnp.bfloat16)                              # bf16 HBM round trip

    s = jnp.sum(h, axis=0, keepdims=True)                            # (1, H) f32
    sq = jnp.sum(h * h, axis=0, keepdims=True)                       # (1, H) f32
    # Pack into 8 sublanes (keeps the stats block (8, H)-aligned): row 0 = sum,
    # row 1 = sum of squares, rows 2..7 = 0.
    row = jax.lax.broadcasted_iota(jnp.int32, (8, s.shape[1]), 0)
    stats_ref[...] = jnp.where(row == 0, s, jnp.where(row == 1, sq, 0.0))


def _bn_relu_fc2_kernel(h_ref, scale_ref, shift_ref, w2_ref, b2_ref, o_ref):
    """Phase 2 (parallel over N-tiles): folded BatchNorm (precomputed scale/shift) +
    ReLU + Linear2 on the MXU."""
    a = jnp.maximum(h_ref[...].astype(jnp.float32) * scale_ref[...] + shift_ref[...], 0.0)
    out = jnp.dot(a.astype(jnp.bfloat16), w2_ref[...],
                  preferred_element_type=jnp.float32) + b2_ref[...]   # (tn, out_dim) f32
    o_ref[...] = out.astype(o_ref.dtype)


# --------------------------------------------------------------------------------------
# Tiling / VMEM heuristics (generation-aware)
# --------------------------------------------------------------------------------------

def _tpu_vmem_capacity_bytes():
    try:
        cap = int(getattr(pltpu.get_tpu_info(), "vmem_capacity_bytes", 0))
        if cap > 0:
            return cap
    except Exception:
        pass
    return 64 * 1024 * 1024          # conservative fallback (v7x per-core VMEM)


def _pick_tile(n, vmem_cap):
    """Largest MXU-friendly row tile: 2048 on 128 MiB-VMEM chips (v5e/v6e), 1024 on v7x.
    Prefer multiples of 128/256 and pad N rather than accept odd divisors."""
    target = 2048 if vmem_cap >= 100 * 1024 * 1024 else 1024
    if n <= target:
        return n
    candidates = sorted({c for c in (target, target // 2, 512, 256, 128) if c >= 128},
                        reverse=True)
    best, best_pad = candidates[0], (-n) % candidates[0]
    for cand in candidates[1:]:
        pad = (-n) % cand
        if pad < best_pad:
            best, best_pad = cand, pad
    return best


def _vmem_limit(working_set_bytes, vmem_cap):
    hard_cap = (vmem_cap * 3) // 4   # leave headroom for compiler scratch
    return int(min(hard_cap, max(32 * 1024 * 1024, 2 * working_set_bytes)))


# --------------------------------------------------------------------------------------
# Wrapper
# --------------------------------------------------------------------------------------

def prediction_mlp(x, w1t, b1, gamma, beta, w2t, b2):
    """Forward pass of prediction_MLP.  x: (N, in_dim).  Weights pre-transposed to
    (in_features, out_features); bf16 weights are used as-is (cast only if f32).
    b1 is accepted for API parity but is mathematically redundant under training-mode
    BatchNorm (it cancels) and is not used."""
    del b1
    n, in_dim = x.shape
    hidden = w1t.shape[1]
    out_dim = w2t.shape[1]

    vmem_cap = _tpu_vmem_capacity_bytes()
    tn = _pick_tile(n, vmem_cap)
    n_pad = ((n + tn - 1) // tn) * tn
    if n_pad != n:
        # Zero rows give h == 0 (no layer-1 bias), contributing 0 to sum / sum-of-squares;
        # mean/var below divide by the true N, so BN statistics are exact.
        x = jnp.pad(x, ((0, n_pad - n), (0, 0)))
    grid = (n_pad // tn,)
    num_tiles = grid[0]

    w1_bf = w1t if w1t.dtype == jnp.bfloat16 else w1t.astype(jnp.bfloat16)
    w2_bf = w2t if w2t.dtype == jnp.bfloat16 else w2t.astype(jnp.bfloat16)
    x_bytes = x.dtype.itemsize

    # ---------------- phase 1: h = x @ w1 (bf16 out), per-tile partial stats ----------------
    ws1 = 2 * (tn * in_dim * x_bytes + in_dim * hidden * 2 + tn * hidden * 2
               + 8 * hidden * 4)
    h, stats = pl.pallas_call(
        _fc1_stats_kernel,
        grid=grid,
        in_specs=[
            pl.BlockSpec((tn, in_dim), lambda i: (i, 0)),
            # TODO(synk): on v7x, pipeline_mode=pl.Buffered(1) on this constant-index
            # weight spec would avoid double-buffering the 2 MB w1 tile.
            pl.BlockSpec((in_dim, hidden), lambda i: (0, 0)),
        ],
        out_specs=[
            pl.BlockSpec((tn, hidden), lambda i: (i, 0)),
            pl.BlockSpec((8, hidden), lambda i: (i, 0)),       # per-tile partial stats
        ],
        out_shape=[
            jax.ShapeDtypeStruct((n_pad, hidden), jnp.bfloat16),
            jax.ShapeDtypeStruct((num_tiles * 8, hidden), jnp.float32),
        ],
        compiler_params=pltpu.CompilerParams(
            dimension_semantics=("parallel",),                 # megacore-shardable
            vmem_limit_bytes=_vmem_limit(ws1, vmem_cap),
        ),
        cost_estimate=pl.CostEstimate(
            flops=2 * n_pad * in_dim * hidden,
            transcendentals=0,
            bytes_accessed=(n_pad * in_dim * x_bytes + in_dim * hidden * 2
                            + n_pad * hidden * 2 + num_tiles * 8 * hidden * 4),
        ),
    )(x, w1_bf)

    # ---------------- tiny host-side (XLA) reduction + BN fold ----------------
    stats = stats.reshape(num_tiles, 8, hidden)
    h_sum = jnp.sum(stats[:, 0, :], axis=0)                    # (H,) f32
    h_sq = jnp.sum(stats[:, 1, :], axis=0)                     # (H,) f32
    inv_n = 1.0 / float(n)
    mean = h_sum * inv_n
    var = h_sq * inv_n - mean * mean                           # biased variance (train BN)
    inv_std = jax.lax.rsqrt(var + _BN_EPS)
    g = gamma.reshape(-1).astype(jnp.float32)
    b = beta.reshape(-1).astype(jnp.float32)
    scale = (g * inv_std).reshape(1, hidden)
    shift = (b - mean * g * inv_std).reshape(1, hidden)
    b2_2 = b2.reshape(1, out_dim).astype(jnp.float32)

    # ---------------- phase 2: folded BN + ReLU + Linear2 (parallel over N-tiles) ------------
    ws2 = 2 * (tn * hidden * 2 + hidden * out_dim * 2 + tn * out_dim * 4) \
        + 3 * hidden * 4 + out_dim * 4
    out = pl.pallas_call(
        _bn_relu_fc2_kernel,
        grid=grid,
        in_specs=[
            pl.BlockSpec((tn, hidden), lambda i: (i, 0)),
            pl.BlockSpec((1, hidden), lambda i: (0, 0)),
            pl.BlockSpec((1, hidden), lambda i: (0, 0)),
            pl.BlockSpec((hidden, out_dim), lambda i: (0, 0)),
            pl.BlockSpec((1, out_dim), lambda i: (0, 0)),
        ],
        out_specs=pl.BlockSpec((tn, out_dim), lambda i: (i, 0)),
        out_shape=jax.ShapeDtypeStruct((n_pad, out_dim), jnp.float32),
        compiler_params=pltpu.CompilerParams(
            dimension_semantics=("parallel",),
            vmem_limit_bytes=_vmem_limit(ws2, vmem_cap),
        ),
        cost_estimate=pl.CostEstimate(
            flops=2 * n_pad * hidden * out_dim + 4 * n_pad * hidden,
            transcendentals=0,
            bytes_accessed=(n_pad * hidden * 2 + hidden * out_dim * 2
                            + n_pad * out_dim * 4 + 2 * hidden * 4 + out_dim * 4),
        ),
    )(h, scale, shift, w2_bf, b2_2)

    return out[:n] if n_pad != n else out


# --------------------------------------------------------------------------------------
# Params / reference
# --------------------------------------------------------------------------------------

def init_params(key, in_dim):
    """Deterministic init mimicking nn.Linear defaults (U(-1/sqrt(fan_in), +))."""
    out_dim = in_dim
    hidden_dim = in_dim // 4
    k1, k2, k3, k4 = jax.random.split(key, 4)

    bound1 = 1.0 / (in_dim ** 0.5)
    w1 = jax.random.uniform(k1, (hidden_dim, in_dim), jnp.float32, -bound1, bound1)
    b1 = jax.random.uniform(k2, (hidden_dim,), jnp.float32, -bound1, bound1)

    bound2 = 1.0 / (hidden_dim ** 0.5)
    w2 = jax.random.uniform(k3, (out_dim, hidden_dim), jnp.float32, -bound2, bound2)
    b2 = jax.random.uniform(k4, (out_dim,), jnp.float32, -bound2, bound2)

    gamma = jnp.ones((hidden_dim,), jnp.float32)    # BatchNorm1d weight
    beta = jnp.zeros((hidden_dim,), jnp.float32)    # BatchNorm1d bias

    return dict(
        w1t=w1.T, b1=b1[None, :],
        gamma=gamma[None, :], beta=beta[None, :],
        w2t=w2.T, b2=b2[None, :],
    )


def reference_forward(x, p):
    """Pure-JAX f32 reference matching the PyTorch module (training-mode BN, bias kept)."""
    h = x @ p["w1t"] + p["b1"]
    mean = jnp.mean(h, axis=0, keepdims=True)
    var = jnp.mean((h - mean) ** 2, axis=0, keepdims=True)
    h = (h - mean) / jnp.sqrt(var + _BN_EPS) * p["gamma"] + p["beta"]
    h = jnp.maximum(h, 0.0)
    return h @ p["w2t"] + p["b2"]


# --------------------------------------------------------------------------------------
# Test
# --------------------------------------------------------------------------------------

if __name__ == "__main__":
    key = jax.random.PRNGKey(0)
    kx, kp = jax.random.split(key)

    # Small shapes consistent with the module (in_dim divisible by 4 -> hidden = in_dim//4).
    # NOTE: real SimSiam sizes (in_dim=2048, hidden=512, batch>=512) are 128-lane aligned;
    # these toy shapes are correctness-only and should not drive tuning.
    batch, in_dim = 16, 32
    x = jax.random.normal(kx, (batch, in_dim), jnp.float32)
    params = init_params(kp, in_dim)

    # Weights handed over in bf16 (cast hoisted out of the per-call path).
    w1t_bf = params["w1t"].astype(jnp.bfloat16)
    w2t_bf = params["w2t"].astype(jnp.bfloat16)

    fwd = jax.jit(prediction_mlp)
    out = fwd(x, w1t_bf, params["b1"], params["gamma"],
              params["beta"], w2t_bf, params["b2"])
    out = jax.block_until_ready(out)

    ref = reference_forward(x, params)
    assert out.shape == ref.shape == (batch, in_dim)
    max_err = jnp.max(jnp.abs(out - ref))
    # bf16 MXU operands / bf16 intermediate h with f32 accumulation -> small error vs f32 ref.
    assert jnp.allclose(out, ref, atol=5e-2, rtol=5e-2), f"max abs err {max_err}"

    print("KERNEL_OK")
</pallas_src>

<mosaic_0001>
module attributes {stable_mosaic.version = 11 : i64} {
  func.func @_bn_relu_fc2_kernel(%arg0: i32, %arg1: memref<16x8xbf16, #tpu.memory_space<vmem>>, %arg2: memref<1x8xf32, #tpu.memory_space<vmem>>, %arg3: memref<1x8xf32, #tpu.memory_space<vmem>>, %arg4: memref<8x32xbf16, #tpu.memory_space<vmem>>, %arg5: memref<1x32xf32, #tpu.memory_space<vmem>>, %arg6: memref<16x32xf32, #tpu.memory_space<vmem>>) attributes {dimension_semantics = [#tpu.dimension_semantics<parallel>], iteration_bounds = array<i64: 1>, scalar_prefetch = 0 : i64, scratch_operands = 0 : i64, tpu.core_type = #tpu.core_type<tc>, window_params = [{transform_indices = @transform_0, window_bounds = array<i64: 16, 8>}, {pipeline_mode = #tpu.pipeline_mode<synchronous>, transform_indices = @transform_1, window_bounds = array<i64: 1, 8>}, {pipeline_mode = #tpu.pipeline_mode<synchronous>, transform_indices = @transform_2, window_bounds = array<i64: 1, 8>}, {pipeline_mode = #tpu.pipeline_mode<synchronous>, transform_indices = @transform_3, window_bounds = array<i64: 8, 32>}, {pipeline_mode = #tpu.pipeline_mode<synchronous>, transform_indices = @transform_4, window_bounds = array<i64: 1, 32>}, {transform_indices = @transform_5, window_bounds = array<i64: 16, 32>}]} {
    %c0 = arith.constant 0 : index
    %c0_0 = arith.constant 0 : index
    %0 = vector.load %arg1[%c0, %c0_0] : memref<16x8xbf16, #tpu.memory_space<vmem>>, vector<16x8xbf16>
    %1 = arith.extf %0 : vector<16x8xbf16> to vector<16x8xf32>
    %c0_1 = arith.constant 0 : index
    %c0_2 = arith.constant 0 : index
    %2 = vector.load %arg2[%c0_1, %c0_2] : memref<1x8xf32, #tpu.memory_space<vmem>>, vector<1x8xf32>
    %3 = vector.broadcast %2 : vector<1x8xf32> to vector<16x8xf32>
    %4 = arith.mulf %1, %3 : vector<16x8xf32>
    %c0_3 = arith.constant 0 : index
    %c0_4 = arith.constant 0 : index
    %5 = vector.load %arg3[%c0_3, %c0_4] : memref<1x8xf32, #tpu.memory_space<vmem>>, vector<1x8xf32>
    %6 = vector.broadcast %5 : vector<1x8xf32> to vector<16x8xf32>
    %7 = arith.addf %4, %6 : vector<16x8xf32>
    %cst = arith.constant 0.000000e+00 : f32
    %8 = vector.broadcast %cst : f32 to vector<16x8xf32>
    %9 = arith.maximumf %7, %8 : vector<16x8xf32>
    %10 = arith.truncf %9 : vector<16x8xf32> to vector<16x8xbf16>
    %c0_5 = arith.constant 0 : index
    %c0_6 = arith.constant 0 : index
    %11 = vector.load %arg4[%c0_5, %c0_6] : memref<8x32xbf16, #tpu.memory_space<vmem>>, vector<8x32xbf16>
    %cst_7 = arith.constant dense<0.000000e+00> : vector<16x32xf32>
    %12 = tpu.matmul %10, %11, %cst_7 {dimension_numbers = #tpu.dot_dimension_numbers<[1], [0], [0], [1], [0, 0, 1, 1], [], []>} : vector<16x8xbf16>, vector<8x32xbf16>, vector<16x32xf32> -> vector<16x32xf32>
    %c0_8 = arith.constant 0 : index
    %c0_9 = arith.constant 0 : index
    %13 = vector.load %arg5[%c0_8, %c0_9] : memref<1x32xf32, #tpu.memory_space<vmem>>, vector<1x32xf32>
    %14 = vector.broadcast %13 : vector<1x32xf32> to vector<16x32xf32>
    %15 = arith.addf %12, %14 : vector<16x32xf32>
    %c0_10 = arith.constant 0 : index
    %c0_11 = arith.constant 0 : index
    %16 = vector.load %arg6[%c0_10, %c0_11] : memref<16x32xf32, #tpu.memory_space<vmem>>, vector<16x32xf32>
    tpu.vector_store %arg6[%c0_10, %c0_11], %15 {strides = array<i32>} : memref<16x32xf32, #tpu.memory_space<vmem>>, vector<16x32xf32>,
    return
  }
  func.func @transform_0(%arg0: i32) -> (i32, i32) {
    %c0_i32 = arith.constant 0 : i32
    %c0_i32_0 = arith.constant 0 : i32
    return %arg0, %c0_i32 : i32, i32
  }
  func.func @transform_1(%arg0: i32) -> (i32, i32) {
    %c0_i32 = arith.constant 0 : i32
    %c0_i32_0 = arith.constant 0 : i32
    %c0_i32_1 = arith.constant 0 : i32
    return %c0_i32, %c0_i32_0 : i32, i32
  }
  func.func @transform_2(%arg0: i32) -> (i32, i32) {
    %c0_i32 = arith.constant 0 : i32
    %c0_i32_0 = arith.constant 0 : i32
    %c0_i32_1 = arith.constant 0 : i32
    return %c0_i32, %c0_i32_0 : i32, i32
  }
  func.func @transform_3(%arg0: i32) -> (i32, i32) {
    %c0_i32 = arith.constant 0 : i32
    %c0_i32_0 = arith.constant 0 : i32
    %c0_i32_1 = arith.constant 0 : i32
    return %c0_i32, %c0_i32_0 : i32, i32
  }
  func.func @transform_4(%arg0: i32) -> (i32, i32) {
    %c0_i32 = arith.constant 0 : i32
    %c0_i32_0 = arith.constant 0 : i32
    %c0_i32_1 = arith.constant 0 : i32
    return %c0_i32, %c0_i32_0 : i32, i32
  }
  func.func @transform_5(%arg0: i32) -> (i32, i32) {
    %c0_i32 = arith.constant 0 : i32
    %c0_i32_0 = arith.constant 0 : i32
    return %arg0, %c0_i32 : i32, i32
  }
}

module attributes {stable_mosaic.version = 11 : i64} {
  func.func @_fc1_stats_kernel(%arg0: i32, %arg1: memref<16x32xf32, #tpu.memory_space<vmem>>, %arg2: memref<32x8xbf16, #tpu.memory_space<vmem>>, %arg3: memref<16x8xbf16, #tpu.memory_space<vmem>>, %arg4: memref<8x8xf32, #tpu.memory_space<vmem>>) attributes {dimension_semantics = [#tpu.dimension_semantics<parallel>], iteration_bounds = array<i64: 1>, scalar_prefetch = 0 : i64, scratch_operands = 0 : i64, tpu.core_type = #tpu.core_type<tc>, window_params = [{transform_indices = @transform_0, window_bounds = array<i64: 16, 32>}, {pipeline_mode = #tpu.pipeline_mode<synchronous>, transform_indices = @transform_1, window_bounds = array<i64: 32, 8>}, {transform_indices = @transform_2, window_bounds = array<i64: 16, 8>}, {transform_indices = @transform_3, window_bounds = array<i64: 8, 8>}]} {
    %c0 = arith.constant 0 : index
    %c0_0 = arith.constant 0 : index
    %0 = vector.load %arg1[%c0, %c0_0] : memref<16x32xf32, #tpu.memory_space<vmem>>, vector<16x32xf32>
    %1 = arith.truncf %0 : vector<16x32xf32> to vector<16x32xbf16>
    %c0_1 = arith.constant 0 : index
    %c0_2 = arith.constant 0 : index
    %2 = vector.load %arg2[%c0_1, %c0_2] : memref<32x8xbf16, #tpu.memory_space<vmem>>, vector<32x8xbf16>
    %cst = arith.constant dense<0.000000e+00> : vector<16x8xf32>
    %3 = tpu.matmul %1, %2, %cst {dimension_numbers = #tpu.dot_dimension_numbers<[1], [0], [0], [1], [0, 0, 1, 1], [], []>} : vector<16x32xbf16>, vector<32x8xbf16>, vector<16x8xf32> -> vector<16x8xf32>
    %4 = arith.truncf %3 : vector<16x8xf32> to vector<16x8xbf16>
    %c0_3 = arith.constant 0 : index
    %c0_4 = arith.constant 0 : index
    %5 = vector.load %arg3[%c0_3, %c0_4] : memref<16x8xbf16, #tpu.memory_space<vmem>>, vector<16x8xbf16>
    tpu.vector_store %arg3[%c0_3, %c0_4], %4 {strides = array<i32>} : memref<16x8xbf16, #tpu.memory_space<vmem>>, vector<16x8xbf16>,
    %cst_5 = arith.constant dense<0.000000e+00> : vector<8xf32>
    %6 = vector.multi_reduction <add>, %3, %cst_5 [0] : vector<16x8xf32> to vector<8xf32>
    %7 = vector.shape_cast %6 : vector<8xf32> to vector<1x8xf32>
    %8 = arith.mulf %3, %3 : vector<16x8xf32>
    %cst_6 = arith.constant dense<0.000000e+00> : vector<8xf32>
    %9 = vector.multi_reduction <add>, %8, %cst_6 [0] : vector<16x8xf32> to vector<8xf32>
    %10 = vector.shape_cast %9 : vector<8xf32> to vector<1x8xf32>
    %11 = tpu.iota {dimensions = array<i32: 0>} : vector<8x8xi32>
    %c0_i32 = arith.constant 0 : i32
    %12 = vector.broadcast %c0_i32 : i32 to vector<8x8xi32>
    %13 = arith.cmpi eq, %11, %12 : vector<8x8xi32>
    %c1_i32 = arith.constant 1 : i32
    %14 = vector.broadcast %c1_i32 : i32 to vector<8x8xi32>
    %15 = arith.cmpi eq, %11, %14 : vector<8x8xi32>
    %cst_7 = arith.constant 0.000000e+00 : f32
    %16 = vector.shape_cast %10 : vector<1x8xf32> to vector<1x8xf32>
    %17 = vector.broadcast %16 : vector<1x8xf32> to vector<8x8xf32>
    %18 = vector.broadcast %cst_7 : f32 to vector<8x8xf32>
    %19 = arith.select %15, %17, %18 : vector<8x8xi1>, vector<8x8xf32>
    %20 = vector.shape_cast %7 : vector<1x8xf32> to vector<1x8xf32>
    %21 = vector.broadcast %20 : vector<1x8xf32> to vector<8x8xf32>
    %22 = arith.select %13, %21, %19 : vector<8x8xi1>, vector<8x8xf32>
    %c0_8 = arith.constant 0 : index
    %c0_9 = arith.constant 0 : index
    %23 = vector.load %arg4[%c0_8, %c0_9] : memref<8x8xf32, #tpu.memory_space<vmem>>, vector<8x8xf32>
    tpu.vector_store %arg4[%c0_8, %c0_9], %22 {strides = array<i32>} : memref<8x8xf32, #tpu.memory_space<vmem>>, vector<8x8xf32>,
    return
  }
  func.func @transform_0(%arg0: i32) -> (i32, i32) {
    %c0_i32 = arith.constant 0 : i32
    %c0_i32_0 = arith.constant 0 : i32
    return %arg0, %c0_i32 : i32, i32
  }
  func.func @transform_1(%arg0: i32) -> (i32, i32) {
    %c0_i32 = arith.constant 0 : i32
    %c0_i32_0 = arith.constant 0 : i32
    %c0_i32_1 = arith.constant 0 : i32
    return %c0_i32, %c0_i32_0 : i32, i32
  }
  func.func @transform_2(%arg0: i32) -> (i32, i32) {
    %c0_i32 = arith.constant 0 : i32
    %c0_i32_0 = arith.constant 0 : i32
    return %arg0, %c0_i32 : i32, i32
  }
  func.func @transform_3(%arg0: i32) -> (i32, i32) {
    %c0_i32 = arith.constant 0 : i32
    %c0_i32_0 = arith.constant 0 : i32
    return %arg0, %c0_i32 : i32, i32
  }
}

</mosaic_0001>

<llo_original>
// kernel: prediction_mlp.2
$region0: #{prediction_mlp.2}
  #allocation0 [shape = 'u32[]', space=smem, size = 0x4, offset = 0x4, fixed_abs, tag = 'smem constant byte address 0x4 - core index']
  #allocation1 [shape = 'u32[72,128]{1,0:T(1,128)}', space=vmem, size = 0x9000, scoped, tag = 'internal scratch']
  %s0 = inlined_call_operand.vmem [shape: f32[16,32], index: 0, kind: input, shape index: {}]
  %s1 = inlined_call_operand.vmem [shape: bf16[32,8], index: 1, kind: input, shape index: {}]
  %s2 = inlined_call_operand.vmem [shape: bf16[16,8], index: 2, kind: output, shape index: {0}]
  %s3 = inlined_call_operand.vmem [shape: f32[8,8], index: 3, kind: output, shape index: {1}]
  %4 = xla_tuple %s2, %s3
  %s5 = sld [smem:[#allocation0]]
  $region26: #{prediction_mlp.2} parent=0
    _
  %s7 = ssub.s32 1, %s5
  %s8 = scalar_select 0, %s7, %s5
  // Predicated region
  $region2: #{prediction_mlp.2} parent=0 // pred_check
    _
  $region3: #{prediction_mlp.2} parent=0 // pred_check_branch
    %10 = sbr.rel (0) target = $region5
  $region4: #{prediction_mlp.2} parent=0 // pred_region
    _
  $region5: #{prediction_mlp.2} parent=0 // pred_fallthru
    _
  // Predicated region
  $region6: #{prediction_mlp.2} parent=0 // pred_check
    _
  $region7: #{prediction_mlp.2} parent=0 // pred_check_branch
    %12 = sbr.rel (0) target = $region9
  $region8: #{prediction_mlp.2} parent=0 // pred_region
    _
  $region9: #{prediction_mlp.2} parent=0 // pred_fallthru
    _
  %v14 = vld [vmem:[%s0] sm:$0xff]
  %v15 = vld [vmem:[%s0 + $0x8] sm:$0xff]
  %v16 = vpack.c.bf16 %v15, %v14
  %v17 = vld [vmem:[%s1] sm:$0xf]
  %v18 = vld [vmem:[%s1 + $0x4] sm:$0xf]
  %v19 = vld [vmem:[%s1 + $0x8] sm:$0xf]
  %v20 = vld [vmem:[%s1 + $0xc] sm:$0xf]
  %v25 = vunpack.c.l.b16 %v17
  %v26 = vunpack.c.l.b16 %v18
  %v27 = vunpack.c.l.b16 %v19
  %v28 = vunpack.c.l.b16 %v20
  %v29 = vpack.c.b16 %v26, %v25
  %v30 = vpack.c.b16 %v28, %v27
  %vm33 = vcmask 261120
  %v35 = vsel %vm33, %v16, 0
  %37 = vmatpush.bf16.msra.mxu0 0
  %38 = vmatpush.bf16.msra.mxu0 0
  %39 = vmatpush.bf16.msra.mxu0 0
  %40 = vmatpush.bf16.msra.mxu0 0
  %41 = vmatpush.bf16.msra.mxu0 0
  %42 = vmatpush.bf16.msra.mxu0 0
  %43 = vmatpush.bf16.msra.mxu0 %v30
  %44 = vmatpush.bf16.msra.mxu0 %v29
  %45 = vmatmul.bf16.gmra.mxu0 %v35
  %v46 = vpop.f32.mrf.mxu0
  %v47 = vadd.f32 0.0, %v46
  %v48 = vpop.f32.mrf.mxu0
  %v49 = vadd.f32 0.0, %v48
  %50 = vdwg.mxu0
  %v51 = vpack.c.bf16 %v47, %v47
  %v52 = vpack.c.bf16 %v49, %v49
  %vm53 = vcmask 60416
  %54 = vst.msk [vmem:[%s2] sm:$0xf] %vm53, %v51
  %55 = vst.msk [vmem:[%s2 + $0x4] sm:$0xf] %vm53, %v52
  %vm56 = vcmask 64512
  %v57 = vsel %vm56, %v47, 0.0
  %v58 = vsel %vm56, %v49, 0.0
  %v59 = vadd.f32 %v57, %v58
  %v60 = vrot.slane %v59, 4
  %v61 = vadd.f32 %v59, %v60
  %v62 = vrot.slane %v61, 2
  %v63 = vadd.f32 %v61, %v62
  %v64 = vrot.slane %v63, 1
  %v65 = vadd.f32 %v63, %v64
  %v66 = vmul.f32 %v47, %v47
  %v67 = vmul.f32 %v49, %v49
  %v68 = vsel %vm56, %v66, 0.0
  %v69 = vsel %vm56, %v67, 0.0
  %v70 = vadd.f32 %v68, %v69
  %v71 = vrot.slane %v70, 4
  %v72 = vadd.f32 %v70, %v71
  %v73 = vrot.slane %v72, 2
  %v74 = vadd.f32 %v72, %v73
  %v75 = vrot.slane %v74, 1
  %v76 = vadd.f32 %v74, %v75
  %v77 = vlaneseq
  %v78 = vshrl.u32 %v77, 7
  %vm79 = vcmp.eq.s32.totalorder %v78, 0
  %vm80 = vcmp.eq.s32.totalorder %v78, 1
  %v81 = vsel %vm80, %v76, 0.0
  %v82 = vsel %vm79, %v65, %v81
  %83 = vst.msk [vmem:[%s3] sm:$0xff] %vm56, %v82
  // Predicated region
  $region10: #{prediction_mlp.2} parent=0 // pred_check
    _
  $region11: #{prediction_mlp.2} parent=0 // pred_check_branch
    %85 = sbr.rel (0) target = $region13
  $region12: #{prediction_mlp.2} parent=0 // pred_region
    _
  $region13: #{prediction_mlp.2} parent=0 // pred_fallthru
    _
  // Predicated region
  $region14: #{prediction_mlp.2} parent=0 // pred_check
    _
  $region15: #{prediction_mlp.2} parent=0 // pred_check_branch
    %87 = sbr.rel (0) target = $region17
  $region16: #{prediction_mlp.2} parent=0 // pred_region
    _
  $region17: #{prediction_mlp.2} parent=0 // pred_fallthru
    _
  // Predicated region
  $region18: #{prediction_mlp.2} parent=0 // pred_check
    _
  $region19: #{prediction_mlp.2} parent=0 // pred_check_branch
    %89 = sbr.rel (0) target = $region21
  $region20: #{prediction_mlp.2} parent=0 // pred_region
    _
  $region21: #{prediction_mlp.2} parent=0 // pred_fallthru
    _
  // Predicated region
  $region22: #{prediction_mlp.2} parent=0 // pred_check
    _
  $region23: #{prediction_mlp.2} parent=0 // pred_check_branch
    %91 = sbr.rel (0) target = $region25
  $region24: #{prediction_mlp.2} parent=0 // pred_region
    _
  $region25: #{prediction_mlp.2} parent=0 // pred_fallthru
    _

// kernel: prediction_mlp.3
$region0: #{prediction_mlp.3}
  #allocation0 [shape = 'u32[]', space=smem, size = 0x4, offset = 0x4, fixed_abs, tag = 'smem constant byte address 0x4 - core index']
  #allocation1 [shape = 'u32[72,128]{1,0:T(1,128)}', space=vmem, size = 0x9000, scoped, tag = 'internal scratch']
  %s0 = inlined_call_operand.vmem [shape: bf16[16,8], index: 0, kind: input, shape index: {}]
  %s1 = inlined_call_operand.vmem [shape: f32[1,8], index: 1, kind: input, shape index: {}]
  %s2 = inlined_call_operand.vmem [shape: f32[1,8], index: 2, kind: input, shape index: {}]
  %s3 = inlined_call_operand.vmem [shape: bf16[8,32], index: 3, kind: input, shape index: {}]
  %s4 = inlined_call_operand.vmem [shape: f32[1,32], index: 4, kind: input, shape index: {}]
  %s5 = inlined_call_operand.hbm [shape: f32[16,32], index: 5, kind: output, shape index: {}]
  %s6 = sld [smem:[#allocation0]]
  $region30: #{prediction_mlp.3} parent=0
    _
  %s8 = ssub.s32 1, %s6
  %s9 = scalar_select 0, %s8, %s6
  $region1: #{prediction_mlp.3} parent=0
    #allocation2 [shape = 'u8[8192]{0}', space=vmem, size = 0x2000, scoped, tag = 'output window, operand 0, single buffered']
    #allocation3 [shape = 's32[1]{0}', space=sflag, size = 0x4, scoped, tag = 'scoped memory for prediction_mlp.3']
    %10 = vsyncpa [#allocation3], 0
    // Predicated region
    $region2: #{prediction_mlp.3} parent=1 // pred_check
      _
    $region3: #{prediction_mlp.3} parent=1 // pred_check_branch
      %12 = sbr.rel (0) target = $region5
    $region4: #{prediction_mlp.3} parent=1 // pred_region
      _
    $region5: #{prediction_mlp.3} parent=1 // pred_fallthru
      _
    // Predicated region
    $region6: #{prediction_mlp.3} parent=1 // pred_check
      _
    $region7: #{prediction_mlp.3} parent=1 // pred_check_branch
      %14 = sbr.rel (0) target = $region9
    $region8: #{prediction_mlp.3} parent=1 // pred_region
      _
    $region9: #{prediction_mlp.3} parent=1 // pred_fallthru
      _
    // Predicated region
    $region10: #{prediction_mlp.3} parent=1 // pred_check
      _
    $region11: #{prediction_mlp.3} parent=1 // pred_check_branch
      %16 = sbr.rel (0) target = $region13
    $region12: #{prediction_mlp.3} parent=1 // pred_region
      _
    $region13: #{prediction_mlp.3} parent=1 // pred_fallthru
      _
    // Predicated region
    $region14: #{prediction_mlp.3} parent=1 // pred_check
      _
    $region15: #{prediction_mlp.3} parent=1 // pred_check_branch
      %18 = sbr.rel (0) target = $region17
    $region16: #{prediction_mlp.3} parent=1 // pred_region
      _
    $region17: #{prediction_mlp.3} parent=1 // pred_fallthru
      _
    // Predicated region
    $region18: #{prediction_mlp.3} parent=1 // pred_check
      _
    $region19: #{prediction_mlp.3} parent=1 // pred_check_branch
      %20 = sbr.rel (0) target = $region21
    $region20: #{prediction_mlp.3} parent=1 // pred_region
      _
    $region21: #{prediction_mlp.3} parent=1 // pred_fallthru
      _
    %v22 = vld [vmem:[%s0] sm:$0xf]
    %v23 = vld [vmem:[%s0 + $0x4] sm:$0xf]
    %v24 = vunpack.c.l.bf16 %v22
    %v25 = vunpack.c.l.bf16 %v23
    %v26 = vld [vmem:[%s1] sm:$0x1]
    %v28 = vperm.slane %v26, 0
    %v30 = vmul.f32 %v24, %v28
    %v31 = vmul.f32 %v25, %v28
    %v32 = vld [vmem:[%s2] sm:$0x1]
    %v34 = vperm.slane %v32, 0
    %v36 = vadd.f32 %v30, %v34
    %v37 = vadd.f32 %v31, %v34
    %v38 = vmax.f32 %v36, 0.0
    %v39 = vmax.f32 %v37, 0.0
    %v40 = vpack.c.bf16 %v39, %v38
    %v41 = vld [vmem:[%s3] sm:$0xf]
    %v42 = vld [vmem:[%s4] sm:$0x1]
    %v44 = vperm.slane %v42, 0
    %vm46 = vcmask 64512
    %v48 = vsel %vm46, %v40, 0
    %vm50 = vcmask 1043456
    %v52 = vsel %vm50, %v41, 0
    %54 = vmatpush.bf16.msra.mxu0 0
    %55 = vmatpush.bf16.msra.mxu0 0
    %56 = vmatpush.bf16.msra.mxu0 0
    %57 = vmatpush.bf16.msra.mxu0 0
    %58 = vmatpush.bf16.msra.mxu0 0
    %59 = vmatpush.bf16.msra.mxu0 0
    %60 = vmatpush.bf16.msra.mxu0 0
    %61 = vmatpush.bf16.msra.mxu0 %v52
    %62 = vmatmul.bf16.gmra.mxu0 %v48
    %v63 = vpop.f32.mrf.mxu0
    %v64 = vadd.f32 %v44, %v63
    %v65 = vpop.f32.mrf.mxu0
    %v66 = vadd.f32 %v44, %v65
    %67 = vdwg.mxu0
    %vm68 = vcmask 261120
    %69 = vst.msk [vmem:[#allocation2] sm:$0xff] %vm68, %v64
    %70 = vst.msk [vmem:[#allocation2 + $0x8] sm:$0xff] %vm68, %v66
    // Predicated region
    $region22: #{prediction_mlp.3} parent=1 // pred_check
      _
    $region23: #{prediction_mlp.3} parent=1 // pred_check_branch
      %72 = sbr.rel (0) target = $region25
    $region24: #{prediction_mlp.3} parent=1 // pred_region
      %74 = vsyncadd [#allocation3], 0
      %s75 = sshll.u32 [#allocation2], 4
      %s76 = int_to_ptr.vmem [resolvable:$true] %s75
      %s77 = sshll.u32 %s5, 4
      %s78 = int_to_ptr.hbm [resolvable:$true] %s77
      %83 = dma.vmem_to_hbm [thread:$0]  %s76, 256, %s78, [#allocation3], 128, 128, 8
    $region25: #{prediction_mlp.3} parent=1 // pred_fallthru
      _
    // Predicated region
    $region26: #{prediction_mlp.3} parent=1 // pred_check
      _
    $region27: #{prediction_mlp.3} parent=1 // pred_check_branch
      %85 = sbr.rel (0) target = $region29
    $region28: #{prediction_mlp.3} parent=1 // pred_region
      %87 = dma.done [#allocation3], 256
    $region29: #{prediction_mlp.3} parent=1 // pred_fallthru
      _
    %88 = vsyncpa [#allocation3], 1

</llo_original>
